<compile_context>
chip_gen: v7x
topology: tpu7x:2x2x1
jax: 0.10.0
libtpu: 0.0.40
codegen_flags: <defaults>
</compile_context>

<pallas_src>
import jax
import jax.numpy as jnp
from jax.experimental import pallas as pl
from jax.experimental.pallas import tpu as pltpu


def _decoder_mlp_kernel(x_ref, w1_ref, b1_ref, w2_ref, b2_ref, w3_ref, b3_ref,
                        o_ref):
    """One (tm x tn) output tile of the fused 3-layer MLP decoder."""
    x = x_ref[...].astype(jnp.bfloat16)

    # Layer 1: E -> 2E, ReLU (f32 accumulate on the MXU, f32 elementwise).
    h1 = jnp.dot(x, w1_ref[...], preferred_element_type=jnp.float32)
    h1 = jnp.maximum(h1 + b1_ref[...], 0.0)

    # Layer 2: 2E -> 4E, ReLU.
    h2 = jnp.dot(h1.astype(jnp.bfloat16), w2_ref[...],
                 preferred_element_type=jnp.float32)
    h2 = jnp.maximum(h2 + b2_ref[...], 0.0)

    # Layer 3 (dominant cost): 4E -> tn slice of 3*S*S.
    logits = jnp.dot(h2.astype(jnp.bfloat16), w3_ref[...],
                     preferred_element_type=jnp.float32)
    logits = logits + b3_ref[...]

    # sigmoid(z) = 1 / (1 + exp(-z)); exp and the approx reciprocal both run
    # on the EUP slot, leaving the VALU free.
    o_ref[...] = pl.reciprocal(1.0 + jnp.exp(-logits), approx=True)


def _pick_tile(dim, candidates):
    """Largest candidate that exactly divides `dim`, else the full dim."""
    for t in candidates:
        if t <= dim and dim % t == 0:
            return t
    return dim


def decoder_forward(x, params):
    """Fused Pallas forward pass of the Decoder.

    Args:
      x: [B, E] float32.
      params: dict with w1[E,2E], b1[1,2E], w2[2E,4E], b2[1,4E],
              w3[4E,3*S*S], b3[1,3*S*S]  (all float32).
    Returns:
      [B, 3*S*S] float32 in (0, 1).
    """
    B, E = x.shape
    H1 = params["w1"].shape[1]
    H2 = params["w2"].shape[1]
    out_dim = params["w3"].shape[1]

    # Weights stream as bf16 (half the HBM->VMEM bytes, native MXU dtype).
    # In an inference loop, pre-cast these once outside and reuse.
    w1 = params["w1"].astype(jnp.bfloat16)
    w2 = params["w2"].astype(jnp.bfloat16)
    w3 = params["w3"].astype(jnp.bfloat16)
    b1, b2, b3 = params["b1"], params["b2"], params["b3"]

    # N tiles: multiples of 128 (lane-dense, unmasked stores); 512/256 fill the
    # 2x256x256 MXU on v6e/v7x. If out_dim is not 128-divisible, fall back to a
    # single full-width tile (valid: full-extent block).
    tn = _pick_tile(out_dim, (512, 256, 128))
    # Batch tiles: multiples of 8 (sublane) when tiling; small batches stay as
    # one full-extent block.
    tm = B if B <= 256 else _pick_tile(B, (256, 128, 64, 32, 16, 8))

    grid = (pl.cdiv(B, tm), pl.cdiv(out_dim, tn))

    # Per-tile VMEM footprint (the pipeline double-buffers it) + headroom,
    # clamped under the smallest physical VMEM (64 MiB on v7x).
    tile_bytes = (tm * E * 4                       # x tile (f32)
                  + E * H1 * 2 + H1 * 4            # w1 (bf16) + b1 (f32)
                  + H1 * H2 * 2 + H2 * 4           # w2 + b2
                  + H2 * tn * 2 + tn * 4           # w3 tile + b3 tile
                  + tm * tn * 4)                   # out tile (f32)
    vmem_limit = int(min(max(2 * tile_bytes + (8 << 20), 32 << 20), 60 << 20))

    return pl.pallas_call(
        _decoder_mlp_kernel,
        out_shape=jax.ShapeDtypeStruct((B, out_dim), jnp.float32),
        grid=grid,
        in_specs=[
            pl.BlockSpec((tm, E), lambda i, j: (i, 0)),    # x: per batch tile
            pl.BlockSpec((E, H1), lambda i, j: (0, 0)),    # w1: resident
            pl.BlockSpec((1, H1), lambda i, j: (0, 0)),    # b1
            pl.BlockSpec((H1, H2), lambda i, j: (0, 0)),   # w2: resident
            pl.BlockSpec((1, H2), lambda i, j: (0, 0)),    # b2
            pl.BlockSpec((H2, tn), lambda i, j: (0, j)),   # w3: streamed over N
            pl.BlockSpec((1, tn), lambda i, j: (0, j)),    # b3
        ],
        out_specs=pl.BlockSpec((tm, tn), lambda i, j: (i, j)),
        compiler_params=pltpu.CompilerParams(
            dimension_semantics=("parallel", "parallel"),
            vmem_limit_bytes=vmem_limit),
    )(x, w1, b1, w2, b2, w3, b3)


def init_decoder_params(key, encoding_dim, img_size):
    """Deterministic synthetic parameters (shapes match the nn.Linear layers)."""
    out_size = 3 * img_size * img_size
    dims = [(encoding_dim, encoding_dim * 2),
            (encoding_dim * 2, encoding_dim * 4),
            (encoding_dim * 4, out_size)]
    params = {}
    for i, (fan_in, fan_out) in enumerate(dims, start=1):
        key, kw, kb = jax.random.split(key, 3)
        bound = 1.0 / jnp.sqrt(float(fan_in))  # PyTorch-style uniform bound
        params[f"w{i}"] = jax.random.uniform(
            kw, (fan_in, fan_out), jnp.float32, -bound, bound)
        params[f"b{i}"] = jax.random.uniform(
            kb, (1, fan_out), jnp.float32, -bound, bound)
    return params


def decoder_reference(x, p):
    """Pure-JAX f32 reference for correctness checking."""
    h1 = jnp.maximum(x @ p["w1"] + p["b1"], 0.0)
    h2 = jnp.maximum(h1 @ p["w2"] + p["b2"], 0.0)
    return jax.nn.sigmoid(h2 @ p["w3"] + p["b3"])


if __name__ == "__main__":
    encoding_dim = 32
    img_size = 16          # output dim = 3 * 16 * 16 = 768
    batch = 2

    key = jax.random.PRNGKey(0)
    key_x, key_p = jax.random.split(key)

    x = jax.random.normal(key_x, (batch, encoding_dim), dtype=jnp.float32)
    params = init_decoder_params(key_p, encoding_dim, img_size)

    out = jax.block_until_ready(decoder_forward(x, params))

    ref = decoder_reference(x, params)
    assert out.shape == (batch, 3 * img_size * img_size)
    err = float(jnp.max(jnp.abs(out - ref)))
    # bf16 matmul inputs (f32 accumulation) + approx reciprocal before a
    # sigmoid => ~1e-3 abs err.
    assert err < 2e-2, f"max abs err = {err}"

    print("KERNEL_OK")
</pallas_src>

<mosaic_0001>
module attributes {stable_mosaic.version = 11 : i64} {
  func.func @_decoder_mlp_kernel(%arg0: i32, %arg1: i32, %arg2: memref<2x32xf32, #tpu.memory_space<vmem>>, %arg3: memref<32x64xbf16, #tpu.memory_space<vmem>>, %arg4: memref<1x64xf32, #tpu.memory_space<vmem>>, %arg5: memref<64x128xbf16, #tpu.memory_space<vmem>>, %arg6: memref<1x128xf32, #tpu.memory_space<vmem>>, %arg7: memref<128x256xbf16, #tpu.memory_space<vmem>>, %arg8: memref<1x256xf32, #tpu.memory_space<vmem>>, %arg9: memref<2x256xf32, #tpu.memory_space<vmem>>) attributes {dimension_semantics = [#tpu.dimension_semantics<parallel>, #tpu.dimension_semantics<parallel>], iteration_bounds = array<i64: 1, 3>, scalar_prefetch = 0 : i64, scratch_operands = 0 : i64, tpu.core_type = #tpu.core_type<tc>, window_params = [{transform_indices = @transform_0, window_bounds = array<i64: 2, 32>}, {pipeline_mode = #tpu.pipeline_mode<synchronous>, transform_indices = @transform_1, window_bounds = array<i64: 32, 64>}, {pipeline_mode = #tpu.pipeline_mode<synchronous>, transform_indices = @transform_2, window_bounds = array<i64: 1, 64>}, {pipeline_mode = #tpu.pipeline_mode<synchronous>, transform_indices = @transform_3, window_bounds = array<i64: 64, 128>}, {pipeline_mode = #tpu.pipeline_mode<synchronous>, transform_indices = @transform_4, window_bounds = array<i64: 1, 128>}, {transform_indices = @transform_5, window_bounds = array<i64: 128, 256>}, {transform_indices = @transform_6, window_bounds = array<i64: 1, 256>}, {transform_indices = @transform_7, window_bounds = array<i64: 2, 256>}]} {
    %c0 = arith.constant 0 : index
    %c0_0 = arith.constant 0 : index
    %0 = vector.load %arg2[%c0, %c0_0] : memref<2x32xf32, #tpu.memory_space<vmem>>, vector<2x32xf32>
    %1 = arith.truncf %0 : vector<2x32xf32> to vector<2x32xbf16>
    %c0_1 = arith.constant 0 : index
    %c0_2 = arith.constant 0 : index
    %2 = vector.load %arg3[%c0_1, %c0_2] : memref<32x64xbf16, #tpu.memory_space<vmem>>, vector<32x64xbf16>
    %cst = arith.constant dense<0.000000e+00> : vector<2x64xf32>
    %3 = tpu.matmul %1, %2, %cst {dimension_numbers = #tpu.dot_dimension_numbers<[1], [0], [0], [1], [0, 0, 1, 1], [], []>} : vector<2x32xbf16>, vector<32x64xbf16>, vector<2x64xf32> -> vector<2x64xf32>
    %c0_3 = arith.constant 0 : index
    %c0_4 = arith.constant 0 : index
    %4 = vector.load %arg4[%c0_3, %c0_4] : memref<1x64xf32, #tpu.memory_space<vmem>>, vector<1x64xf32>
    %5 = vector.broadcast %4 : vector<1x64xf32> to vector<2x64xf32>
    %6 = arith.addf %3, %5 : vector<2x64xf32>
    %cst_5 = arith.constant 0.000000e+00 : f32
    %7 = vector.broadcast %cst_5 : f32 to vector<2x64xf32>
    %8 = arith.maximumf %6, %7 : vector<2x64xf32>
    %9 = arith.truncf %8 : vector<2x64xf32> to vector<2x64xbf16>
    %c0_6 = arith.constant 0 : index
    %c0_7 = arith.constant 0 : index
    %10 = vector.load %arg5[%c0_6, %c0_7] : memref<64x128xbf16, #tpu.memory_space<vmem>>, vector<64x128xbf16>
    %cst_8 = arith.constant dense<0.000000e+00> : vector<2x128xf32>
    %11 = tpu.matmul %9, %10, %cst_8 {dimension_numbers = #tpu.dot_dimension_numbers<[1], [0], [0], [1], [0, 0, 1, 1], [], []>} : vector<2x64xbf16>, vector<64x128xbf16>, vector<2x128xf32> -> vector<2x128xf32>
    %c0_9 = arith.constant 0 : index
    %c0_10 = arith.constant 0 : index
    %12 = vector.load %arg6[%c0_9, %c0_10] : memref<1x128xf32, #tpu.memory_space<vmem>>, vector<1x128xf32>
    %13 = vector.broadcast %12 : vector<1x128xf32> to vector<2x128xf32>
    %14 = arith.addf %11, %13 : vector<2x128xf32>
    %cst_11 = arith.constant 0.000000e+00 : f32
    %15 = vector.broadcast %cst_11 : f32 to vector<2x128xf32>
    %16 = arith.maximumf %14, %15 : vector<2x128xf32>
    %17 = arith.truncf %16 : vector<2x128xf32> to vector<2x128xbf16>
    %c0_12 = arith.constant 0 : index
    %c0_13 = arith.constant 0 : index
    %18 = vector.load %arg7[%c0_12, %c0_13] : memref<128x256xbf16, #tpu.memory_space<vmem>>, vector<128x256xbf16>
    %cst_14 = arith.constant dense<0.000000e+00> : vector<2x256xf32>
    %19 = tpu.matmul %17, %18, %cst_14 {dimension_numbers = #tpu.dot_dimension_numbers<[1], [0], [0], [1], [0, 0, 1, 1], [], []>} : vector<2x128xbf16>, vector<128x256xbf16>, vector<2x256xf32> -> vector<2x256xf32>
    %c0_15 = arith.constant 0 : index
    %c0_16 = arith.constant 0 : index
    %20 = vector.load %arg8[%c0_15, %c0_16] : memref<1x256xf32, #tpu.memory_space<vmem>>, vector<1x256xf32>
    %21 = vector.broadcast %20 : vector<1x256xf32> to vector<2x256xf32>
    %22 = arith.addf %19, %21 : vector<2x256xf32>
    %cst_17 = arith.constant 0.000000e+00 : f32
    %23 = vector.broadcast %cst_17 : f32 to vector<2x256xf32>
    %24 = arith.subf %23, %22 : vector<2x256xf32>
    %25 = math.exp %24 : vector<2x256xf32>
    %cst_18 = arith.constant 1.000000e+00 : f32
    %26 = vector.broadcast %cst_18 : f32 to vector<2x256xf32>
    %27 = arith.addf %26, %25 : vector<2x256xf32>
    %28 = tpu.reciprocal %27 {approx = true} : vector<2x256xf32> -> vector<2x256xf32>
    %c0_19 = arith.constant 0 : index
    %c0_20 = arith.constant 0 : index
    %29 = vector.load %arg9[%c0_19, %c0_20] : memref<2x256xf32, #tpu.memory_space<vmem>>, vector<2x256xf32>
    tpu.vector_store %arg9[%c0_19, %c0_20], %28 {strides = array<i32>} : memref<2x256xf32, #tpu.memory_space<vmem>>, vector<2x256xf32>,
    return
  }
  func.func @transform_0(%arg0: i32, %arg1: i32) -> (i32, i32) {
    %c0_i32 = arith.constant 0 : i32
    %c0_i32_0 = arith.constant 0 : i32
    return %arg0, %c0_i32 : i32, i32
  }
  func.func @transform_1(%arg0: i32, %arg1: i32) -> (i32, i32) {
    %c0_i32 = arith.constant 0 : i32
    %c0_i32_0 = arith.constant 0 : i32
    %c0_i32_1 = arith.constant 0 : i32
    return %c0_i32, %c0_i32_0 : i32, i32
  }
  func.func @transform_2(%arg0: i32, %arg1: i32) -> (i32, i32) {
    %c0_i32 = arith.constant 0 : i32
    %c0_i32_0 = arith.constant 0 : i32
    %c0_i32_1 = arith.constant 0 : i32
    return %c0_i32, %c0_i32_0 : i32, i32
  }
  func.func @transform_3(%arg0: i32, %arg1: i32) -> (i32, i32) {
    %c0_i32 = arith.constant 0 : i32
    %c0_i32_0 = arith.constant 0 : i32
    %c0_i32_1 = arith.constant 0 : i32
    return %c0_i32, %c0_i32_0 : i32, i32
  }
  func.func @transform_4(%arg0: i32, %arg1: i32) -> (i32, i32) {
    %c0_i32 = arith.constant 0 : i32
    %c0_i32_0 = arith.constant 0 : i32
    %c0_i32_1 = arith.constant 0 : i32
    return %c0_i32, %c0_i32_0 : i32, i32
  }
  func.func @transform_5(%arg0: i32, %arg1: i32) -> (i32, i32) {
    %c0_i32 = arith.constant 0 : i32
    %c0_i32_0 = arith.constant 0 : i32
    return %c0_i32, %arg1 : i32, i32
  }
  func.func @transform_6(%arg0: i32, %arg1: i32) -> (i32, i32) {
    %c0_i32 = arith.constant 0 : i32
    %c0_i32_0 = arith.constant 0 : i32
    return %c0_i32, %arg1 : i32, i32
  }
  func.func @transform_7(%arg0: i32, %arg1: i32) -> (i32, i32) {
    %c0_i32 = arith.constant 0 : i32
    return %arg0, %arg1 : i32, i32
  }
}

</mosaic_0001>

<llo_original>
// kernel: tpu_custom_call.1
$region0: #{tpu_custom_call.1}
  #allocation0 [shape = 'u32[]', space=smem, size = 0x4, offset = 0x4, fixed_abs, tag = 'smem constant byte address 0x4 - core index']
  #allocation1 [shape = 'u32[144,128]{1,0:T(1,128)}', space=vmem, size = 0x12000, scoped, tag = 'internal scratch']
  %s0 = inlined_call_operand.hbm [shape: f32[2,32], index: 0, kind: input, shape index: {}]
  %s1 = inlined_call_operand.hbm [shape: bf16[32,64], index: 1, kind: input, shape index: {}]
  %s2 = inlined_call_operand.vmem [shape: f32[1,64], index: 2, kind: input, shape index: {}]
  %s3 = inlined_call_operand.hbm [shape: bf16[64,128], index: 3, kind: input, shape index: {}]
  %s4 = inlined_call_operand.vmem [shape: f32[1,128], index: 4, kind: input, shape index: {}]
  %s5 = inlined_call_operand.hbm [shape: bf16[128,768], index: 5, kind: input, shape index: {}]
  %s6 = inlined_call_operand.vmem [shape: f32[1,768], index: 6, kind: input, shape index: {}]
  %s7 = inlined_call_operand.hbm [shape: f32[2,768], index: 7, kind: output, shape index: {}]
  %s8 = sld [smem:[#allocation0]]
  $region77: #{tpu_custom_call.1} parent=0
    _
  %s10 = ssub.s32 1, %s8
  %s11 = scalar_select 0, %s10, %s8
  $region1: #{tpu_custom_call.1} parent=0
    #allocation2 [shape = 'u8[1024]{0}', space=vmem, size = 0x400, scoped, tag = 'input window, operand 0, single buffered']
    #allocation3 [shape = 's32[2]{0}', space=sflag, size = 0x8, scoped, tag = 'scoped memory for tpu_custom_call.1']
    #allocation4 [shape = 's32[2]{0}', space=sflag, size = 0x8, scoped, tag = 'scoped memory for tpu_custom_call.1']
    #allocation5 [shape = 'u8[8192]{0}', space=vmem, size = 0x2000, scoped, tag = 'input window, operand 1, single buffered']
    #allocation6 [shape = 's32[1]{0}', space=sflag, size = 0x4, scoped, tag = 'scoped memory for tpu_custom_call.1']
    #allocation7 [shape = 'u8[16384]{0}', space=vmem, size = 0x4000, scoped, tag = 'input window, operand 3, single buffered']
    #allocation8 [shape = 'u8[131072]{0}', space=vmem, size = 0x20000, scoped, tag = 'input window, operand 5']
    #allocation9 [shape = 's32[2]{0}', space=sflag, size = 0x8, scoped, tag = 'scoped memory for tpu_custom_call.1']
    #allocation10 [shape = 'u8[4096]{0}', space=vmem, size = 0x1000, scoped, tag = 'output window, operand 0']
    %12 = vsyncpa [#allocation3], 0
    %13 = vsyncpa [#allocation6], 0
    %14 = vsyncpa [#allocation9], 0
    %s15 = scalar_lea.sflag [#allocation9], 1
    %16 = vsyncpa %s15, 0
    %17 = vsyncpa [#allocation4], 0
    %s18 = scalar_lea.sflag [#allocation4], 1
    %19 = vsyncpa %s18, 0
    loop: start=0, step=1, limit=5
    $region2: #{tpu_custom_call.1} parent=1 // loop_pre_header
      _
    $region3: #{tpu_custom_call.1} parent=1 // loop_header
      %s21 = sphi 0, %s25
      %p22 = scmp.ge.s32.totalorder %s21, 5
      %s28 = sphi 0, %s40
      %s29 = sphi 0, %s36
      %s30 = sphi 0, %s28
      %s31 = sphi 0, %s29
      %s32 = sphi 0, %s30
      %s33 = sphi 0, %s31
      %s43 = sphi 0, %s45
      %s46 = sphi 0, %s43
      %s47 = sphi 0, %s46
      %s63 = sphi 0, %s47
      %s67 = sphi 0, %s67
      %s69 = sphi 0, %s67
      %s70 = sphi 0, %s69
      %s84 = sphi 0, %s70
      %s88 = sphi 0, %s88
      %s90 = sphi 0, %s88
      %s91 = sphi 0, %s90
      %s105 = sphi 0, %s91
      %s109 = sphi 0, %s109
      %s111 = sphi 0, %s109
      %s112 = sphi 0, %s111
      %s126 = sphi 0, %s112
      %s130 = sphi 0, %s130
      %s132 = sphi 0, %s130
      %s133 = sphi 0, %s132
      %s147 = sphi 0, %s133
      %s153 = sphi 0, %s155
      %s156 = sphi 0, %s153
      %s157 = sphi 0, %s156
      %s173 = sphi 0, %s157
      %s179 = sphi 0, %s181
      %s182 = sphi 0, %s179
      %s183 = sphi 0, %s182
      %s199 = sphi 0, %s183
      %s207 = sphi 0, %s209
      %s210 = sphi 0, %s207
      %s211 = sphi 0, %s210
      %s227 = sphi 0, %s211
    $region4: #{tpu_custom_call.1} parent=1 // loop_header_branch
      %24 = sbr.rel (%p22) target = $region8
    $region5: #{tpu_custom_call.1} parent=1 // loop_body
      %s26 = ssub.s32 %s21, 1
      %s27 = ssub.s32 %s21, 2
      %s34 = sadd.s32 1, %s29
      %p35 = scmp.ge.s32.totalorder %s34, 3
      %s36 = scalar_select %p35, 0, %s34
      %s37 = sadd.s32 1, %s28
      %s38 = scalar_select %p35, %s37, %s28
      %p39 = scmp.ge.s32.totalorder %s38, 1
      %s40 = scalar_select %p39, 0, %s38
      %s41 = ssub.s32 %s28, %s40
      %p42 = scmp.eq.s32.totalorder %s41, 0
      %s44 = sadd.s32 %s43, 1
      %s45 = scalar_select %p42, %s43, %s44
      %p48 = pneg %p42
      %p49 = scmp.eq.s32.totalorder %s21, 2
      %p50 = por %p48, %p49
      %p51 = scmp.ne.s32.totalorder %s43, %s46
      %p52 = scmp.eq.s32.totalorder %s21, 0
      %p53 = por %p51, %p52
      %p54 = scmp.ne.s32.totalorder %s43, %s46
      %p55 = scmp.eq.s32.totalorder %s26, 2
      %p56 = por %p54, %p55
      %p57 = scmp.ne.s32.totalorder %s46, %s47
      %p58 = scmp.eq.s32.totalorder %s26, 0
      %p59 = por %p57, %p58
      %p60 = scmp.ne.s32.totalorder %s46, %s47
      %p61 = scmp.eq.s32.totalorder %s27, 2
      %p62 = por %p60, %p61
      %p64 = scmp.ne.s32.totalorder %s47, %s63
      %p65 = scmp.eq.s32.totalorder %s27, 0
      %p66 = por %p64, %p65
      %s68 = sadd.s32 %s67, 1
      %p71 = scmp.eq.s32.totalorder %s21, 2
      %p72 = scmp.ne.s32.totalorder %s67, %s69
      %p73 = scmp.eq.s32.totalorder %s21, 0
      %p74 = por %p72, %p73
      %p75 = scmp.ne.s32.totalorder %s67, %s69
      %p76 = scmp.eq.s32.totalorder %s26, 2
      %p77 = por %p75, %p76
      %p78 = scmp.ne.s32.totalorder %s69, %s70
      %p79 = scmp.eq.s32.totalorder %s26, 0
      %p80 = por %p78, %p79
      %p81 = scmp.ne.s32.totalorder %s69, %s70
      %p82 = scmp.eq.s32.totalorder %s27, 2
      %p83 = por %p81, %p82
      %p85 = scmp.ne.s32.totalorder %s70, %s84
      %p86 = scmp.eq.s32.totalorder %s27, 0
      %p87 = por %p85, %p86
      %s89 = sadd.s32 %s88, 1
      %p92 = scmp.eq.s32.totalorder %s21, 2
      %p93 = scmp.ne.s32.totalorder %s88, %s90
      %p94 = scmp.eq.s32.totalorder %s21, 0
      %p95 = por %p93, %p94
      %p96 = scmp.ne.s32.totalorder %s88, %s90
      %p97 = scmp.eq.s32.totalorder %s26, 2
      %p98 = por %p96, %p97
      %p99 = scmp.ne.s32.totalorder %s90, %s91
      %p100 = scmp.eq.s32.totalorder %s26, 0
      %p101 = por %p99, %p100
      %p102 = scmp.ne.s32.totalorder %s90, %s91
      %p103 = scmp.eq.s32.totalorder %s27, 2
      %p104 = por %p102, %p103
      %p106 = scmp.ne.s32.totalorder %s91, %s105
      %p107 = scmp.eq.s32.totalorder %s27, 0
      %p108 = por %p106, %p107
      %s110 = sadd.s32 %s109, 1
      %p113 = scmp.eq.s32.totalorder %s21, 2
      %p114 = scmp.ne.s32.totalorder %s109, %s111
      %p115 = scmp.eq.s32.totalorder %s21, 0
      %p116 = por %p114, %p115
      %p117 = scmp.ne.s32.totalorder %s109, %s111
      %p118 = scmp.eq.s32.totalorder %s26, 2
      %p119 = por %p117, %p118
      %p120 = scmp.ne.s32.totalorder %s111, %s112
      %p121 = scmp.eq.s32.totalorder %s26, 0
      %p122 = por %p120, %p121
      %p123 = scmp.ne.s32.totalorder %s111, %s112
      %p124 = scmp.eq.s32.totalorder %s27, 2
      %p125 = por %p123, %p124
      %p127 = scmp.ne.s32.totalorder %s112, %s126
      %p128 = scmp.eq.s32.totalorder %s27, 0
      %p129 = por %p127, %p128
      %s131 = sadd.s32 %s130, 1
      %p134 = scmp.eq.s32.totalorder %s21, 2
      %p135 = scmp.ne.s32.totalorder %s130, %s132
      %p136 = scmp.eq.s32.totalorder %s21, 0
      %p137 = por %p135, %p136
      %p138 = scmp.ne.s32.totalorder %s130, %s132
      %p139 = scmp.eq.s32.totalorder %s26, 2
      %p140 = por %p138, %p139
      %p141 = scmp.ne.s32.totalorder %s132, %s133
      %p142 = scmp.eq.s32.totalorder %s26, 0
      %p143 = por %p141, %p142
      %p144 = scmp.ne.s32.totalorder %s132, %s133
      %p145 = scmp.eq.s32.totalorder %s27, 2
      %p146 = por %p144, %p145
      %p148 = scmp.ne.s32.totalorder %s133, %s147
      %p149 = scmp.eq.s32.totalorder %s27, 0
      %p150 = por %p148, %p149
      %s151 = ssub.s32 %s29, %s36
      %p152 = scmp.eq.s32.totalorder %s151, 0
      %s154 = sadd.s32 %s153, 1
      %s155 = scalar_select %p152, %s153, %s154
      %p158 = pneg %p152
      %p159 = scmp.eq.s32.totalorder %s21, 2
      %p160 = por %p158, %p159
      %p161 = scmp.ne.s32.totalorder %s153, %s156
      %p162 = scmp.eq.s32.totalorder %s21, 0
      %p163 = por %p161, %p162
      %p164 = scmp.ne.s32.totalorder %s153, %s156
      %p165 = scmp.eq.s32.totalorder %s26, 2
      %p166 = por %p164, %p165
      %p167 = scmp.ne.s32.totalorder %s156, %s157
      %p168 = scmp.eq.s32.totalorder %s26, 0
      %p169 = por %p167, %p168
      %p170 = scmp.ne.s32.totalorder %s156, %s157
      %p171 = scmp.eq.s32.totalorder %s27, 2
      %p172 = por %p170, %p171
      %p174 = scmp.ne.s32.totalorder %s157, %s173
      %p175 = scmp.eq.s32.totalorder %s27, 0
      %p176 = por %p174, %p175
      %s177 = ssub.s32 %s29, %s36
      %p178 = scmp.eq.s32.totalorder %s177, 0
      %s180 = sadd.s32 %s179, 1
      %s181 = scalar_select %p178, %s179, %s180
      %p184 = pneg %p178
      %p185 = scmp.eq.s32.totalorder %s21, 2
      %p186 = por %p184, %p185
      %p187 = scmp.ne.s32.totalorder %s179, %s182
      %p188 = scmp.eq.s32.totalorder %s21, 0
      %p189 = por %p187, %p188
      %p190 = scmp.ne.s32.totalorder %s179, %s182
      %p191 = scmp.eq.s32.totalorder %s26, 2
      %p192 = por %p190, %p191
      %p193 = scmp.ne.s32.totalorder %s182, %s183
      %p194 = scmp.eq.s32.totalorder %s26, 0
      %p195 = por %p193, %p194
      %p196 = scmp.ne.s32.totalorder %s182, %s183
      %p197 = scmp.eq.s32.totalorder %s27, 2
      %p198 = por %p196, %p197
      %p200 = scmp.ne.s32.totalorder %s183, %s199
      %p201 = scmp.eq.s32.totalorder %s27, 0
      %p202 = por %p200, %p201
      %s203 = ssub.s32 %s28, %s40
      %s204 = ssub.s32 %s29, %s36
      %s205 = sor.u32 %s203, %s204
      %p206 = scmp.eq.s32.totalorder %s205, 0
      %s208 = sadd.s32 %s207, 1
      %s209 = scalar_select %p206, %s207, %s208
      %p212 = pneg %p206
      %p213 = scmp.eq.s32.totalorder %s21, 2
      %p214 = por %p212, %p213
      %p215 = scmp.ne.s32.totalorder %s207, %s210
      %p216 = scmp.eq.s32.totalorder %s21, 0
      %p217 = por %p215, %p216
      %p218 = scmp.ne.s32.totalorder %s207, %s210
      %p219 = scmp.eq.s32.totalorder %s26, 2
      %p220 = por %p218, %p219
      %p221 = scmp.ne.s32.totalorder %s210, %s211
      %p222 = scmp.eq.s32.totalorder %s26, 0
      %p223 = por %p221, %p222
      %p224 = scmp.ne.s32.totalorder %s210, %s211
      %p225 = scmp.eq.s32.totalorder %s27, 2
      %p226 = por %p224, %p225
      %p228 = scmp.ne.s32.totalorder %s211, %s227
      %p229 = scmp.eq.s32.totalorder %s27, 0
      %p230 = por %p228, %p229
      %p231 = scmp.le.s32.totalorder 1, %s21
      %p232 = scmp.lt.s32.totalorder %s21, 4
      %p233 = pnand %p231, %p232
      %p234 = pneg %p233
      // Predicated region
      $region9: #{tpu_custom_call.1} parent=5 // pred_check
        _
      $region10: #{tpu_custom_call.1} parent=5 // pred_check_branch
        %236 = sbr.rel (%p233) target = $region12
      $region11: #{tpu_custom_call.1} parent=5 // pred_region
        %s237 = ssub.s32 %s21, 1
        // Predicated region
        $region13: #{tpu_custom_call.1} parent=11 // pred_check
          %p238 = pneg %p59
        $region14: #{tpu_custom_call.1} parent=11 // pred_check_branch
          %240 = sbr.rel (%p238) target = $region16
        $region15: #{tpu_custom_call.1} parent=11 // pred_region
          %s242 = ssub.s32 32, 32
          %243 = vsyncadd [#allocation3], %s242
          %s244 = smul.addr %s30, 32
          %s245 = scalar_lea.hbm %s0, %s244
          %s247 = sshll.u32 [#allocation2], 4
          %s248 = int_to_ptr.vmem [resolvable:$true] %s247
          %250 = dma.hbm_to_vmem [thread:$0]  %s245, 32, %s248, [#allocation3]
        $region16: #{tpu_custom_call.1} parent=11 // pred_fallthru
          _
        // Predicated region
        $region17: #{tpu_custom_call.1} parent=11 // pred_check
          %p251 = pneg %p80
        $region18: #{tpu_custom_call.1} parent=11 // pred_check_branch
          %253 = sbr.rel (%p251) target = $region20
        $region19: #{tpu_custom_call.1} parent=11 // pred_region
          %s255 = ssub.s32 256, 256
          %256 = vsyncadd [#allocation6], %s255
          %s257 = sshll.u32 [#allocation5], 4
          %s258 = int_to_ptr.vmem [resolvable:$true] %s257
          %263 = dma.hbm_to_vmem [thread:$0]  %s1, 256, %s258, [#allocation6], 64, 64, 4
        $region20: #{tpu_custom_call.1} parent=11 // pred_fallthru
          _
        // Predicated region
        $region21: #{tpu_custom_call.1} parent=11 // pred_check
          %p264 = pneg %p101
        $region22: #{tpu_custom_call.1} parent=11 // pred_check_branch
          %266 = sbr.rel (%p264) target = $region24
        $region23: #{tpu_custom_call.1} parent=11 // pred_region
          _
        $region24: #{tpu_custom_call.1} parent=11 // pred_fallthru
          _
        // Predicated region
        $region25: #{tpu_custom_call.1} parent=11 // pred_check
          %p267 = pneg %p122
        $region26: #{tpu_custom_call.1} parent=11 // pred_check_branch
          %269 = sbr.rel (%p267) target = $region28
        $region27: #{tpu_custom_call.1} parent=11 // pred_region
          %s271 = ssub.s32 512, 512
          %272 = vsyncadd [#allocation6], %s271
          %s273 = sshll.u32 [#allocation7], 4
          %s274 = int_to_ptr.vmem [resolvable:$true] %s273
          %279 = dma.hbm_to_vmem [thread:$0]  %s3, 512, %s274, [#allocation6], 64, 64, 4
        $region28: #{tpu_custom_call.1} parent=11 // pred_fallthru
          _
        // Predicated region
        $region29: #{tpu_custom_call.1} parent=11 // pred_check
          %p280 = pneg %p143
        $region30: #{tpu_custom_call.1} parent=11 // pred_check_branch
          %282 = sbr.rel (%p280) target = $region32
        $region31: #{tpu_custom_call.1} parent=11 // pred_region
          _
        $region32: #{tpu_custom_call.1} parent=11 // pred_fallthru
          _
      $region12: #{tpu_custom_call.1} parent=5 // pred_fallthru
        _
      %p283 = scmp.lt.s32.totalorder %s21, 3
      // Predicated region
      $region33: #{tpu_custom_call.1} parent=5 // pred_check
        %p284 = pneg %p283
      $region34: #{tpu_custom_call.1} parent=5 // pred_check_branch
        %286 = sbr.rel (%p284) target = $region36
      $region35: #{tpu_custom_call.1} parent=5 // pred_region
        // Predicated region
        $region37: #{tpu_custom_call.1} parent=35 // pred_check
          %p287 = pneg %p163
        $region38: #{tpu_custom_call.1} parent=35 // pred_check_branch
          %289 = sbr.rel (%p287) target = $region40
        $region39: #{tpu_custom_call.1} parent=35 // pred_region
          %s290 = sand.u32 %s153, 1
          %s291 = scalar_lea.sflag [#allocation9], %s290
          %s292 = sand.u32 %s153, 1
          %s293 = smul.addr %s292, 128
          %s294 = scalar_lea.vmem [#allocation8], %s293
          %s295 = smul.u32 2, %s29
          %s297 = ssub.s32 2048, 2048
          %298 = vsyncadd %s291, %s297
          %s299 = smul.addr %s295, 64
          %s300 = scalar_lea.hbm %s5, %s299
          %s301 = sshll.u32 %s294, 4
          %s302 = int_to_ptr.vmem [resolvable:$true] %s301
          %307 = dma.hbm_to_vmem [thread:$0]  %s300, 2048, %s302, %s291, 384, 128, 8
        $region40: #{tpu_custom_call.1} parent=35 // pred_fallthru
          _
        // Predicated region
        $region41: #{tpu_custom_call.1} parent=35 // pred_check
          %p308 = pneg %p189
        $region42: #{tpu_custom_call.1} parent=35 // pred_check_branch
          %310 = sbr.rel (%p308) target = $region44
        $region43: #{tpu_custom_call.1} parent=35 // pred_region
          %s311 = smul.u32 2, %s29
          %p312 = scmp.lt.s32.totalorder %s311, 5
          %s313 = scalar_select %p312, %s311, 5
          %s314 = scalar_lea.vmem %s6, %s313
          %s315 = smul.u32 2, %s29
        $region44: #{tpu_custom_call.1} parent=35 // pred_fallthru
          _
      $region36: #{tpu_custom_call.1} parent=5 // pred_fallthru
        _
      %p316 = scmp.le.s32.totalorder 1, %s21
      %p317 = scmp.lt.s32.totalorder %s21, 4
      %p318 = pnand %p316, %p317
      %p319 = pneg %p318
      // Predicated region
      $region45: #{tpu_custom_call.1} parent=5 // pred_check
        _
      $region46: #{tpu_custom_call.1} parent=5 // pred_check_branch
        %321 = sbr.rel (%p318) target = $region48
      $region47: #{tpu_custom_call.1} parent=5 // pred_region
        %s322 = ssub.s32 %s21, 1
        // Predicated region
        $region49: #{tpu_custom_call.1} parent=47 // pred_check
          %p323 = pneg %p59
        $region50: #{tpu_custom_call.1} parent=47 // pred_check_branch
          %325 = sbr.rel (%p323) target = $region52
        $region51: #{tpu_custom_call.1} parent=47 // pred_region
          %326 = dma.done [#allocation3], 32
        $region52: #{tpu_custom_call.1} parent=47 // pred_fallthru
          _
        // Predicated region
        $region53: #{tpu_custom_call.1} parent=47 // pred_check
          %p327 = pneg %p80
        $region54: #{tpu_custom_call.1} parent=47 // pred_check_branch
          %329 = sbr.rel (%p327) target = $region56
        $region55: #{tpu_custom_call.1} parent=47 // pred_region
          %330 = dma.done [#allocation6], 256
        $region56: #{tpu_custom_call.1} parent=47 // pred_fallthru
          _
        // Predicated region
        $region57: #{tpu_custom_call.1} parent=47 // pred_check
          %p331 = pneg %p122
        $region58: #{tpu_custom_call.1} parent=47 // pred_check_branch
          %333 = sbr.rel (%p331) target = $region60
        $region59: #{tpu_custom_call.1} parent=47 // pred_region
          %334 = dma.done [#allocation6], 512
        $region60: #{tpu_custom_call.1} parent=47 // pred_fallthru
          _
        %s335 = sand.u32 %s156, 1
        %s336 = scalar_lea.sflag [#allocation9], %s335
        %s337 = sand.u32 %s156, 1
        %s338 = smul.addr %s337, 128
        %s339 = scalar_lea.vmem [#allocation8], %s338
        // Predicated region
        $region61: #{tpu_custom_call.1} parent=47 // pred_check
          %p340 = pneg %p169
        $region62: #{tpu_custom_call.1} parent=47 // pred_check_branch
          %342 = sbr.rel (%p340) target = $region64
        $region63: #{tpu_custom_call.1} parent=47 // pred_region
          %343 = dma.done %s336, 2048
        $region64: #{tpu_custom_call.1} parent=47 // pred_fallthru
          _
        %p344 = pneg %p59
        %p345 = pneg %p56
        %p346 = pneg %p80
        %p347 = pneg %p77
        %p348 = pneg %p101
        %p349 = pneg %p98
        %p350 = pneg %p122
        %p351 = pneg %p119
        %p352 = pneg %p143
        %p353 = pneg %p140
        %s354 = sand.u32 %s156, 1
        %s355 = scalar_lea.sflag [#allocation9], %s354
        %s356 = sand.u32 %s156, 1
        %s357 = smul.addr %s356, 128
        %s358 = scalar_lea.vmem [#allocation8], %s357
        %p359 = pneg %p169
        %p360 = pneg %p166
        %s361 = smul.u32 2, %s31
        %p362 = scmp.lt.s32.totalorder %s361, 5
        %s363 = scalar_select %p362, %s361, 5
        %s364 = scalar_lea.vmem %s6, %s363
        %p365 = pneg %p195
        %p366 = pneg %p192
        %p367 = pneg %p223
        %p368 = pneg %p220
        %s369 = sand.u32 %s210, 1
        %s370 = scalar_lea.sflag [#allocation4], %s369
        %s371 = sand.u32 %s210, 1
        %s372 = smul.addr %s371, 4
        %s373 = scalar_lea.vmem [#allocation10], %s372
        %s374 = smul.u32 2, %s31
        %s375 = smul.u32 2, %s31
        %p376 = scmp.lt.s32.totalorder %s375, 5
        %s377 = scalar_select %p376, %s375, 5
        %s378 = scalar_lea.vmem %s6, %s377
        %s379 = smul.u32 2, %s31
        %s380 = smul.u32 2, %s31
        %v382 = vld [vmem:[#allocation2] sm:$0x3]
        %v383 = vpack.c.bf16 %v382, %v382
        %v384 = vld [vmem:[#allocation5] sm:$0xf]
        %v385 = vld [vmem:[#allocation5 + $0x4] sm:$0xf]
        %v386 = vld [vmem:[#allocation5 + $0x8] sm:$0xf]
        %v387 = vld [vmem:[#allocation5 + $0xc] sm:$0xf]
        %v388 = vld [vmem:[%s2] sm:$0x1]
        %v390 = vlaneseq
        %v391 = vshrl.u32 %v390, 7
        %v392 = vsub.s32 0, %v391
        %v393 = vrot.slane %v388, %v392
        %v399 = vunpack.c.l.b16 %v384
        %v400 = vunpack.c.l.b16 %v385
        %v401 = vunpack.c.l.b16 %v386
        %v402 = vunpack.c.l.b16 %v387
        %v403 = vpack.c.b16 %v400, %v399
        %v404 = vpack.c.b16 %v402, %v401
        %vm407 = vcmask 261120
        %v409 = vsel %vm407, %v383, 0
        %411 = vmatprep.subr.bf16.mxu0 0
        %412 = vmatpush1.bf16.msra.mxu0 %v403
        %413 = vmatprep.subr.bf16.mxu0 0
        %414 = vmatpush1.bf16.msra.mxu0 %v404
        %415 = vmatprep.subr.bf16.mxu0 0
        %416 = vmatpush1.bf16.msra.mxu0 0
        %417 = vmatprep.subr.bf16.mxu0 0
        %418 = vmatpush1.bf16.msra.mxu0 0
        %419 = vmatprep.subr.bf16.mxu0 0
        %420 = vmatpush1.bf16.msra.mxu0 0
        %421 = vmatprep.subr.bf16.mxu0 0
        %422 = vmatpush1.bf16.msra.mxu0 0
        %423 = vmatprep.subr.bf16.mxu0 0
        %424 = vmatpush1.bf16.msra.mxu0 0
        %425 = vmatprep.subr.bf16.mxu0 0
        %426 = vmatpush1.bf16.msra.mxu0 0
        %427 = vmatprep.subr.bf16.mxu0 0
        %428 = vmatpush1.bf16.msra.mxu0 0
        %429 = vmatprep.subr.bf16.mxu0 0
        %430 = vmatpush1.bf16.msra.mxu0 0
        %431 = vmatprep.subr.bf16.mxu0 0
        %432 = vmatpush1.bf16.msra.mxu0 0
        %433 = vmatprep.subr.bf16.mxu0 0
        %434 = vmatpush1.bf16.msra.mxu0 0
        %435 = vmatprep.subr.bf16.mxu0 0
        %436 = vmatpush1.bf16.msra.mxu0 0
        %437 = vmatprep.subr.bf16.mxu0 0
        %438 = vmatpush1.bf16.msra.mxu0 0
        %439 = vmatprep.subr.bf16.mxu0 0
        %440 = vmatpush1.bf16.msra.mxu0 0
        %441 = vmatprep.subr.bf16.mxu0 0
        %442 = vmatpush1.bf16.msra.mxu0 0
        %443 = vmatprep.mubr.bf16.mxu0 0
        %444 = vmatmul.mubr.bf16.gmra.mrb[0].mxu0 %v409
        %v445 = vpop.f32.mrb[0].mxu0
        %v446 = vadd.f32 %v393, %v445
        %v447 = vpop.f32.mrb[0].mxu0
        %v448 = vpop.f32.mrb[0].mxu0
        %v449 = vpop.f32.mrb[0].mxu0
        %450 = vdwg.mxu0
        %v451 = vmax.f32 %v446, 0.0
        %v452 = vpack.c.bf16 %v451, %v451
        %v453 = vld [vmem:[#allocation7] sm:$0xf]
        %v454 = vld [vmem:[#allocation7 + $0x4] sm:$0xf]
        %v455 = vld [vmem:[#allocation7 + $0x8] sm:$0xf]
        %v456 = vld [vmem:[#allocation7 + $0xc] sm:$0xf]
        %v457 = vld [vmem:[#allocation7 + $0x10] sm:$0xf]
        %v458 = vld [vmem:[#allocation7 + $0x14] sm:$0xf]
        %v459 = vld [vmem:[#allocation7 + $0x18] sm:$0xf]
        %v460 = vld [vmem:[#allocation7 + $0x1c] sm:$0xf]
        %v461 = vld [vmem:[%s4] sm:$0x1]
        %v463 = vlaneseq
        %v464 = vshrl.u32 %v463, 7
        %v465 = vsub.s32 0, %v464
        %v466 = vrot.slane %v461, %v465
        %v476 = vunpack.c.l.b16 %v453
        %v477 = vunpack.c.l.b16 %v454
        %v478 = vunpack.c.l.b16 %v455
        %v479 = vunpack.c.l.b16 %v456
        %v480 = vunpack.c.l.b16 %v457
        %v481 = vunpack.c.l.b16 %v458
        %v482 = vunpack.c.l.b16 %v459
        %v483 = vunpack.c.l.b16 %v460
        %v484 = vpack.c.b16 %v477, %v476
        %v485 = vpack.c.b16 %v479, %v478
        %v486 = vpack.c.b16 %v481, %v480
        %v487 = vpack.c.b16 %v483, %v482
        %vm492 = vcmask 523264
        %v494 = vsel %vm492, %v452, 0
        %496 = vmatprep.subr.bf16.mxu0 0
        %497 = vmatpush1.bf16.msra.mxu0 %v484
        %498 = vmatprep.subr.bf16.mxu0 0
        %499 = vmatpush1.bf16.msra.mxu0 %v485
        %500 = vmatprep.subr.bf16.mxu0 0
        %501 = vmatpush1.bf16.msra.mxu0 %v486
        %502 = vmatprep.subr.bf16.mxu0 0
        %503 = vmatpush1.bf16.msra.mxu0 %v487
        %504 = vmatprep.subr.bf16.mxu0 0
        %505 = vmatpush1.bf16.msra.mxu0 0
        %506 = vmatprep.subr.bf16.mxu0 0
        %507 = vmatpush1.bf16.msra.mxu0 0
        %508 = vmatprep.subr.bf16.mxu0 0
        %509 = vmatpush1.bf16.msra.mxu0 0
        %510 = vmatprep.subr.bf16.mxu0 0
        %511 = vmatpush1.bf16.msra.mxu0 0
        %512 = vmatprep.subr.bf16.mxu0 0
        %513 = vmatpush1.bf16.msra.mxu0 0
        %514 = vmatprep.subr.bf16.mxu0 0
        %515 = vmatpush1.bf16.msra.mxu0 0
        %516 = vmatprep.subr.bf16.mxu0 0
        %517 = vmatpush1.bf16.msra.mxu0 0
        %518 = vmatprep.subr.bf16.mxu0 0
        %519 = vmatpush1.bf16.msra.mxu0 0
        %520 = vmatprep.subr.bf16.mxu0 0
        %521 = vmatpush1.bf16.msra.mxu0 0
        %522 = vmatprep.subr.bf16.mxu0 0
        %523 = vmatpush1.bf16.msra.mxu0 0
        %524 = vmatprep.subr.bf16.mxu0 0
        %525 = vmatpush1.bf16.msra.mxu0 0
        %526 = vmatprep.subr.bf16.mxu0 0
        %527 = vmatpush1.bf16.msra.mxu0 0
        %528 = vmatprep.mubr.bf16.mxu0 0
        %529 = vmatmul.mubr.bf16.gmra.mrb[0].mxu0 %v494
        %v530 = vpop.f32.mrb[0].mxu0
        %v531 = vadd.f32 %v466, %v530
        %v532 = vpop.f32.mrb[0].mxu0
        %v533 = vpop.f32.mrb[0].mxu0
        %v534 = vpop.f32.mrb[0].mxu0
        %535 = vdwg.mxu0
        %v536 = vmax.f32 %v531, 0.0
        %v537 = vpack.c.bf16 %v536, %v536
        %v538 = vld [vmem:[%s339] sm:$0xff]
        %v539 = vld [vmem:[%s339 + $0x8] sm:$0xff]
        %v540 = vld [vmem:[%s339 + $0x10] sm:$0xff]
        %v541 = vld [vmem:[%s339 + $0x18] sm:$0xff]
        %v542 = vld [vmem:[%s339 + $0x20] sm:$0xff]
        %v543 = vld [vmem:[%s339 + $0x28] sm:$0xff]
        %v544 = vld [vmem:[%s339 + $0x30] sm:$0xff]
        %v545 = vld [vmem:[%s339 + $0x38] sm:$0xff]
        %v546 = vld [vmem:[%s339 + $0x40] sm:$0xff]
        %v547 = vld [vmem:[%s339 + $0x48] sm:$0xff]
        %v548 = vld [vmem:[%s339 + $0x50] sm:$0xff]
        %v549 = vld [vmem:[%s339 + $0x58] sm:$0xff]
        %v550 = vld [vmem:[%s339 + $0x60] sm:$0xff]
        %v551 = vld [vmem:[%s339 + $0x68] sm:$0xff]
        %v552 = vld [vmem:[%s339 + $0x70] sm:$0xff]
        %v553 = vld [vmem:[%s339 + $0x78] sm:$0xff]
        %v554 = vld [vmem:[%s378] sm:$0x3]
        %v556 = vlaneseq
        %v557 = vshrl.u32 %v556, 7
        %v558 = vsub.s32 0, %v557
        %v559 = vrot.slane %v554, %v558
        %v560 = vlaneseq
        %v561 = vshrl.u32 %v560, 7
        %v562 = vsub.s32 1, %v561
        %v563 = vrot.slane %v554, %v562
        %v582 = vunpack.c.l.b16 %v538
        %v583 = vunpack.c.h.b16 %v538
        %v584 = vunpack.c.l.b16 %v539
        %v585 = vunpack.c.h.b16 %v539
        %v586 = vunpack.c.l.b16 %v540
        %v587 = vunpack.c.h.b16 %v540
        %v588 = vunpack.c.l.b16 %v541
        %v589 = vunpack.c.h.b16 %v541
        %v590 = vunpack.c.l.b16 %v542
        %v591 = vunpack.c.h.b16 %v542
        %v592 = vunpack.c.l.b16 %v543
        %v593 = vunpack.c.h.b16 %v543
        %v594 = vunpack.c.l.b16 %v544
        %v595 = vunpack.c.h.b16 %v544
        %v596 = vunpack.c.l.b16 %v545
        %v597 = vunpack.c.h.b16 %v545
        %v598 = vunpack.c.l.b16 %v546
        %v599 = vunpack.c.h.b16 %v546
        %v600 = vunpack.c.l.b16 %v547
        %v601 = vunpack.c.h.b16 %v547
        %v602 = vunpack.c.l.b16 %v548
        %v603 = vunpack.c.h.b16 %v548
        %v604 = vunpack.c.l.b16 %v549
        %v605 = vunpack.c.h.b16 %v549
        %v606 = vunpack.c.l.b16 %v550
        %v607 = vunpack.c.h.b16 %v550
        %v608 = vunpack.c.l.b16 %v551
        %v609 = vunpack.c.h.b16 %v551
        %v610 = vunpack.c.l.b16 %v552
        %v611 = vunpack.c.h.b16 %v552
        %v612 = vunpack.c.l.b16 %v553
        %v613 = vunpack.c.h.b16 %v553
        %v614 = vpack.c.b16 %v584, %v582
        %v615 = vpack.c.b16 %v585, %v583
        %v616 = vpack.c.b16 %v588, %v586
        %v617 = vpack.c.b16 %v589, %v587
        %v618 = vpack.c.b16 %v592, %v590
        %v619 = vpack.c.b16 %v593, %v591
        %v620 = vpack.c.b16 %v596, %v594
        %v621 = vpack.c.b16 %v597, %v595
        %v622 = vpack.c.b16 %v600, %v598
        %v623 = vpack.c.b16 %v601, %v599
        %v624 = vpack.c.b16 %v604, %v602
        %v625 = vpack.c.b16 %v605, %v603
        %v626 = vpack.c.b16 %v608, %v606
        %v627 = vpack.c.b16 %v609, %v607
        %v628 = vpack.c.b16 %v612, %v610
        %v629 = vpack.c.b16 %v613, %v611
        %646 = vmatprep.subr.bf16.mxu0 %v615
        %647 = vmatpush1.bf16.msra.mxu0 %v614
        %648 = vmatprep.subr.bf16.mxu0 %v617
        %649 = vmatpush1.bf16.msra.mxu0 %v616
        %650 = vmatprep.subr.bf16.mxu0 %v619
        %651 = vmatpush1.bf16.msra.mxu0 %v618
        %652 = vmatprep.subr.bf16.mxu0 %v621
        %653 = vmatpush1.bf16.msra.mxu0 %v620
        %654 = vmatprep.subr.bf16.mxu0 %v623
        %655 = vmatpush1.bf16.msra.mxu0 %v622
        %656 = vmatprep.subr.bf16.mxu0 %v625
        %657 = vmatpush1.bf16.msra.mxu0 %v624
        %658 = vmatprep.subr.bf16.mxu0 %v627
        %659 = vmatpush1.bf16.msra.mxu0 %v626
        %660 = vmatprep.subr.bf16.mxu0 %v629
        %661 = vmatpush1.bf16.msra.mxu0 %v628
        %662 = vmatprep.subr.bf16.mxu0 0
        %663 = vmatpush1.bf16.msra.mxu0 0
        %664 = vmatprep.subr.bf16.mxu0 0
        %665 = vmatpush1.bf16.msra.mxu0 0
        %666 = vmatprep.subr.bf16.mxu0 0
        %667 = vmatpush1.bf16.msra.mxu0 0
        %668 = vmatprep.subr.bf16.mxu0 0
        %669 = vmatpush1.bf16.msra.mxu0 0
        %670 = vmatprep.subr.bf16.mxu0 0
        %671 = vmatpush1.bf16.msra.mxu0 0
        %672 = vmatprep.subr.bf16.mxu0 0
        %673 = vmatpush1.bf16.msra.mxu0 0
        %674 = vmatprep.subr.bf16.mxu0 0
        %675 = vmatpush1.bf16.msra.mxu0 0
        %676 = vmatprep.subr.bf16.mxu0 0
        %677 = vmatpush1.bf16.msra.mxu0 0
        %678 = vmatprep.mubr.bf16.mxu0 0
        %679 = vmatmul.mubr.bf16.gmra.mrb[0].mxu0 %v537
        %v680 = vpop.f32.mrb[0].mxu0
        %v681 = vadd.f32 %v559, %v680
        %v682 = vpop.f32.mrb[0].mxu0
        %v683 = vadd.f32 %v563, %v682
        %v684 = vpop.f32.mrb[0].mxu0
        %v685 = vpop.f32.mrb[0].mxu0
        %686 = vdwg.mxu0
        %v687 = vsub.f32 0.0, %v681
        %v688 = vsub.f32 0.0, %v683
        %v689 = vmul.f32 %v687, 1.442695
        %v690 = vpow.pop %v689
        %v691 = vmul.f32 %v688, 1.442695
        %v692 = vpow.pop %v691
        %v693 = vadd.f32 %v690, 1.0
        %v694 = vadd.f32 %v692, 1.0
        %v695 = vrcp.pop %v693
        %v696 = vrcp.pop %v694
        %v699 = vcombine.low %v695, %v696
        %v701 = vunpack.c.l.s4 1983009808
        %v702 = vunpack.c.0.s8 %v701
        %v703 = vlaneseq
        %v704 = vshrl.u32 %v703, 7
        %v705 = vsub.s32 %v702, %v704
        %v706 = vrot.slane %v699, %v705
        %708 = vst [vmem:[%s373] sm:$0xf] %v706
        %s709 = sand.u32 %s210, 1
        %s710 = scalar_lea.sflag [#allocation4], %s709
        %s711 = sand.u32 %s210, 1
        %s712 = smul.addr %s711, 4
        %s713 = scalar_lea.vmem [#allocation10], %s712
        // Predicated region
        $region65: #{tpu_custom_call.1} parent=47 // pred_check
          %p714 = pneg %p220
        $region66: #{tpu_custom_call.1} parent=47 // pred_check_branch
          %716 = sbr.rel (%p714) target = $region68
        $region67: #{tpu_custom_call.1} parent=47 // pred_region
          %s717 = smul.u32 2, %s31
          %s719 = ssub.s32 64, 64
          %720 = vsyncadd %s710, %s719
          %s721 = smul.addr %s30, 6
          %s722 = sadd.s32 %s717, %s721
          %s723 = smul.addr %s722, 32
          %s724 = scalar_lea.hbm %s7, %s723
          %s726 = sshll.u32 %s713, 4
          %s727 = int_to_ptr.vmem [resolvable:$true] %s726
          %729 = dma.vmem_to_hbm [thread:$0]  %s727, 64, %s724, %s710
        $region68: #{tpu_custom_call.1} parent=47 // pred_fallthru
          _
      $region48: #{tpu_custom_call.1} parent=5 // pred_fallthru
        _
      %p730 = scmp.le.s32.totalorder 2, %s21
      // Predicated region
      $region69: #{tpu_custom_call.1} parent=5 // pred_check
        %p731 = pneg %p730
      $region70: #{tpu_custom_call.1} parent=5 // pred_check_branch
        %733 = sbr.rel (%p731) target = $region72
      $region71: #{tpu_custom_call.1} parent=5 // pred_region
        %s734 = ssub.s32 %s21, 2
        // Predicated region
        $region73: #{tpu_custom_call.1} parent=71 // pred_check
          %p735 = pneg %p226
        $region74: #{tpu_custom_call.1} parent=71 // pred_check_branch
          %737 = sbr.rel (%p735) target = $region76
        $region75: #{tpu_custom_call.1} parent=71 // pred_region
          %s738 = sand.u32 %s211, 1
          %s739 = scalar_lea.sflag [#allocation4], %s738
          %s740 = sand.u32 %s211, 1
          %s741 = smul.addr %s740, 4
          %s742 = scalar_lea.vmem [#allocation10], %s741
          %743 = dma.done %s739, 64
        $region76: #{tpu_custom_call.1} parent=71 // pred_fallthru
          _
      $region72: #{tpu_custom_call.1} parent=5 // pred_fallthru
        _
    $region6: #{tpu_custom_call.1} parent=1 // loop_footer
      %s25 = sadd.s32 1, %s21
    $region7: #{tpu_custom_call.1} parent=1 // loop_footer_branch
      %20 = sbr.rel target = $region3
    $region8: #{tpu_custom_call.1} parent=1 // loop_exit
      _
    %744 = vsyncpa [#allocation3], 1
    %s745 = scalar_lea.sflag [#allocation3], 1
    %746 = vsyncpa %s745, 1
    %747 = vsyncpa [#allocation6], 1
    %748 = vsyncpa [#allocation9], 1
    %s749 = scalar_lea.sflag [#allocation9], 1
    %750 = vsyncpa %s749, 1
    %751 = vsyncpa [#allocation4], 1
    %s752 = scalar_lea.sflag [#allocation4], 1
    %753 = vsyncpa %s752, 1

</llo_original>
